<compile_context>
chip_gen: v5e
topology: v5e:2x2
jax: 0.10.0
libtpu: 0.0.40
codegen_flags: <defaults>
</compile_context>

<pallas_src>
import functools

import jax
import jax.numpy as jnp
from jax.experimental import pallas as pl
from jax.experimental.pallas import tpu as pltpu


# ----------------------------------------------------------------------------- kernel

def _decomp_kernel(w_ref, x_ref, res_ref, mean_ref, *, out_len, inv_k, precision):
    # w_ref    : (out_len, L)     integer tap-count band matrix (padding folded in)
    # x_ref    : (1, L, TC)       input channel tile
    # res_ref  : (1, out_len, TC) residual output tile
    # mean_ref : (1, out_len, TC) moving-mean output tile
    x = x_ref[0]                                                   # (L, TC)
    x_op = x if x.dtype in (jnp.float32, jnp.bfloat16) else x.astype(jnp.float32)
    # Moving SUM as one banded matmul on the MXU, accumulated in f32.
    acc = jnp.dot(
        w_ref[...], x_op,
        preferred_element_type=jnp.float32,
        precision=precision,
    )                                                              # (out_len, TC) f32
    # Scale by 1/k on the VPU (keeps bf16 W exact: it only stores integer counts).
    mean = (acc * inv_k).astype(mean_ref.dtype)
    mean_ref[0] = mean
    # Residual from the same resident x tile (no second HBM read of x).
    res_ref[0] = x[:out_len, :] - mean


# ----------------------------------------------------------------------------- helpers

def _build_band_matrix(seq_len, kernel_size, dtype):
    """W[t, j] = #{ i in [0,k) : clamp(t + i - pad, 0, L-1) == j }  (tap counts).

    Encodes both the stride-1 AvgPool1d window and the edge ("replicate")
    padding of the PyTorch module, so the padded tensor never exists.  Counts
    are small integers -> exactly representable even in bfloat16.
    """
    pad = (kernel_size - 1) // 2
    out_len = seq_len + 2 * pad - kernel_size + 1
    t = jnp.arange(out_len)
    i = jnp.arange(kernel_size)
    src = jnp.clip(t[:, None] + i[None, :] - pad, 0, seq_len - 1)  # (out_len, k)
    w = jnp.zeros((out_len, seq_len), jnp.float32)
    w = w.at[t[:, None], src].add(1.0)
    return w.astype(dtype), out_len


_VMEM_BUDGET = None


def _vmem_budget_bytes():
    """~75% of per-core VMEM (leaves headroom for Mosaic internal scratch)."""
    global _VMEM_BUDGET
    if _VMEM_BUDGET is None:
        cap = None
        try:
            cap = getattr(pltpu.get_tpu_info(), "vmem_capacity_bytes", None)
        except Exception:
            cap = None
        if not cap or cap <= 0:
            cap = 64 << 20  # conservative default: v7x has 64 MiB per TensorCore
        _VMEM_BUDGET = (int(cap) * 3) // 4
    return _VMEM_BUDGET


def _pick_channel_tile(C, B, L, out_len, itemsize, w_resident_bytes, budget_bytes):
    """Largest lane-dense (multiple-of-128) channel tile that fits the VMEM budget."""
    if C % 128 != 0:
        return C  # full-dim block is always legal
    # Live VMEM per channel lane: double-buffered x tile + 2 double-buffered outputs.
    per_lane = (2 * L + 4 * out_len) * itemsize
    avail = budget_bytes - w_resident_bytes - (1 << 20)  # 1 MiB slack
    max_tc = max(128, avail // max(per_lane, 1))
    max_tc = min(max_tc, 4096)
    tc = min(C, (max_tc // 128) * 128)
    tc = max(tc, 128)
    while C % tc:
        tc -= 128
    # Keep enough grid steps for 2-TensorCore sharding / pipeline overlap.
    while tc > 128 and B * (C // tc) < 8:
        nxt = tc - 128
        while nxt >= 128 and C % nxt:
            nxt -= 128
        if nxt < 128:
            break
        tc = nxt
    return tc


# ----------------------------------------------------------------------------- pallas_call wrapper

_W_SINGLE_BUFFER_OK = None  # lazily discovered: does this JAX accept pl.Buffered(1)?


def _decomp_pallas(x, kernel_size):
    """Core Pallas path. x: (B, L, C) with C lane-friendly (>=128 or full-dim)."""
    B, L, C = x.shape
    w_dtype = jnp.bfloat16 if x.dtype == jnp.bfloat16 else jnp.float32
    w, out_len = _build_band_matrix(L, kernel_size, w_dtype)

    itemsize = jnp.dtype(x.dtype).itemsize
    w_bytes = out_len * L * jnp.dtype(w_dtype).itemsize
    budget = _vmem_budget_bytes()
    # Size the channel tile assuming double-buffered W (worst case / fallback path).
    tc = _pick_channel_tile(C, B, L, out_len, itemsize, 2 * w_bytes, budget)
    n_ct = C // tc

    # Pin full f32 precision for f32 inputs; bf16 inputs use the native MXU path.
    precision = jax.lax.Precision.HIGHEST if w_dtype == jnp.float32 else None
    kernel = functools.partial(
        _decomp_kernel, out_len=out_len, inv_k=1.0 / kernel_size, precision=precision
    )

    # Advisory cost estimate so XLA overlaps surrounding ops with this
    # memory-bound custom call.
    cost = pl.CostEstimate(
        flops=2 * B * out_len * L * C,
        bytes_accessed=B * C * (L + 2 * out_len) * itemsize + w_bytes,
        transcendentals=0,
    )

    def run(w_pipeline_mode):
        if w_pipeline_mode is None:
            w_spec = pl.BlockSpec((out_len, L), lambda b, c: (0, 0))
        else:
            # W's block index never changes -> single-buffer it (halves its VMEM).
            w_spec = pl.BlockSpec(
                (out_len, L), lambda b, c: (0, 0), pipeline_mode=w_pipeline_mode
            )
        return pl.pallas_call(
            kernel,
            out_shape=(
                jax.ShapeDtypeStruct((B, out_len, C), x.dtype),
                jax.ShapeDtypeStruct((B, out_len, C), x.dtype),
            ),
            grid_spec=pltpu.PrefetchScalarGridSpec(
                num_scalar_prefetch=0,
                grid=(B, n_ct),
                in_specs=[
                    w_spec,
                    pl.BlockSpec((1, L, tc), lambda b, c: (b, 0, c)),
                ],
                out_specs=[
                    pl.BlockSpec((1, out_len, tc), lambda b, c: (b, 0, c)),
                    pl.BlockSpec((1, out_len, tc), lambda b, c: (b, 0, c)),
                ],
            ),
            compiler_params=pltpu.CompilerParams(
                dimension_semantics=("parallel", "parallel"),
                vmem_limit_bytes=int(budget),
            ),
            cost_estimate=cost,
        )(w, x)

    global _W_SINGLE_BUFFER_OK
    if _W_SINGLE_BUFFER_OK is not False:
        try:
            out = run(pl.Buffered(1))
            _W_SINGLE_BUFFER_OK = True
            return out
        except Exception:
            _W_SINGLE_BUFFER_OK = False
    return run(None)


def series_decomp(x, kernel_size):
    """JAX/Pallas equivalent of series_decomp.forward. x: (B, L, C) -> (res, mean)."""
    B, L, C = x.shape
    pad = (kernel_size - 1) // 2
    out_len = L + 2 * pad - kernel_size + 1

    if C < 128:
        # Tiny channel count: fold batch into the lane axis (padded to a multiple
        # of 128) so output stores are lane-dense instead of masked partial stores.
        n = B * C
        xt = jnp.transpose(x, (1, 0, 2)).reshape(L, n)
        n_pad = (-n) % 128
        if n_pad:
            xt = jnp.pad(xt, ((0, 0), (0, n_pad)))
        res2, mean2 = _decomp_pallas(xt[None], kernel_size)
        res = jnp.transpose(res2[0, :, :n].reshape(out_len, B, C), (1, 0, 2))
        mean = jnp.transpose(mean2[0, :, :n].reshape(out_len, B, C), (1, 0, 2))
        return res, mean

    return _decomp_pallas(x, kernel_size)


# ----------------------------------------------------------------------------- reference & test

def _reference(x, kernel_size):
    """Pure-JAX (f32) reference mirroring the PyTorch forward."""
    xf = x.astype(jnp.float32)
    pad = (kernel_size - 1) // 2
    front = jnp.repeat(xf[:, 0:1, :], pad, axis=1)
    end = jnp.repeat(xf[:, -1:, :], pad, axis=1)
    xp = jnp.concatenate([front, xf, end], axis=1)
    out_len = xp.shape[1] - kernel_size + 1
    windows = jnp.stack(
        [xp[:, i : i + out_len, :] for i in range(kernel_size)], axis=0
    )
    mean = jnp.mean(windows, axis=0)
    res = xf[:, :out_len, :] - mean
    return res, mean


if __name__ == "__main__":
    key = jax.random.PRNGKey(0)

    configs = [
        # (B, L, C, kernel_size, dtype, tol)
        (2, 16, 8, 5, jnp.float32, 1e-5),      # tiny C -> folded lane-dense path
        (2, 32, 128, 25, jnp.float32, 1e-5),   # lane-dense channel tile, k=25
        (2, 16, 128, 4, jnp.float32, 1e-5),    # even kernel -> out_len = L - 1
        (2, 96, 256, 25, jnp.bfloat16, 5e-2),  # bf16 operands straight to the MXU
    ]

    for idx, (B, L, C, k, dtype, tol) in enumerate(configs):
        key, sub = jax.random.split(key)
        x = jax.random.normal(sub, (B, L, C), dtype=jnp.float32).astype(dtype)

        res, mean = series_decomp(x, k)
        jax.block_until_ready((res, mean))

        res_ref, mean_ref = _reference(x, k)
        assert res.shape == res_ref.shape and mean.shape == mean_ref.shape, f"shape cfg {idx}"
        assert jnp.allclose(mean.astype(jnp.float32), mean_ref, atol=tol, rtol=tol), (
            f"mean mismatch cfg {idx}"
        )
        assert jnp.allclose(res.astype(jnp.float32), res_ref, atol=tol, rtol=tol), (
            f"res mismatch cfg {idx}"
        )

    print("KERNEL_OK")
</pallas_src>

<mosaic_0001>
module attributes {stable_mosaic.version = 11 : i64} {
  func.func @_decomp_kernel(%arg0: i32, %arg1: i32, %arg2: memref<16x16xf32, #tpu.memory_space<vmem>>, %arg3: memref<1x16x128xf32, #tpu.memory_space<vmem>>, %arg4: memref<1x16x128xf32, #tpu.memory_space<vmem>>, %arg5: memref<1x16x128xf32, #tpu.memory_space<vmem>>) attributes {dimension_semantics = [#tpu.dimension_semantics<parallel>, #tpu.dimension_semantics<parallel>], iteration_bounds = array<i64: 1, 1>, scalar_prefetch = 0 : i64, scratch_operands = 0 : i64, tpu.core_type = #tpu.core_type<tc>, window_params = [{pipeline_mode = #tpu.pipeline_mode<synchronous>, transform_indices = @transform_0, window_bounds = array<i64: 16, 16>}, {transform_indices = @transform_1, window_bounds = array<i64: 1, 16, 128>}, {transform_indices = @transform_2, window_bounds = array<i64: 1, 16, 128>}, {transform_indices = @transform_3, window_bounds = array<i64: 1, 16, 128>}]} {
    %c0 = arith.constant 0 : index
    %c0_0 = arith.constant 0 : index
    %c0_1 = arith.constant 0 : index
    %0 = vector.load %arg3[%c0, %c0_0, %c0_1] : memref<1x16x128xf32, #tpu.memory_space<vmem>>, vector<1x16x128xf32>
    %1 = vector.shape_cast %0 : vector<1x16x128xf32> to vector<16x128xf32>
    %c0_2 = arith.constant 0 : index
    %c0_3 = arith.constant 0 : index
    %2 = vector.load %arg2[%c0_2, %c0_3] : memref<16x16xf32, #tpu.memory_space<vmem>>, vector<16x16xf32>
    %cst = arith.constant dense<0.000000e+00> : vector<16x128xf32>
    %3 = tpu.matmul %2, %1, %cst {dimension_numbers = #tpu.dot_dimension_numbers<[1], [0], [0], [1], [0, 0, 1, 1], [], []>, precision = #tpu.contract_precision<fp32>} : vector<16x16xf32>, vector<16x128xf32>, vector<16x128xf32> -> vector<16x128xf32>
    %cst_4 = arith.constant 2.000000e-01 : f32
    %4 = vector.broadcast %cst_4 : f32 to vector<16x128xf32>
    %5 = arith.mulf %3, %4 : vector<16x128xf32>
    %c0_5 = arith.constant 0 : index
    %c0_6 = arith.constant 0 : index
    %c0_7 = arith.constant 0 : index
    %6 = vector.load %arg5[%c0_5, %c0_6, %c0_7] : memref<1x16x128xf32, #tpu.memory_space<vmem>>, vector<1x16x128xf32>
    %7 = vector.shape_cast %6 : vector<1x16x128xf32> to vector<16x128xf32>
    %8 = vector.shape_cast %5 : vector<16x128xf32> to vector<1x16x128xf32>
    tpu.vector_store %arg5[%c0_5, %c0_6, %c0_7], %8 {strides = array<i32>} : memref<1x16x128xf32, #tpu.memory_space<vmem>>, vector<1x16x128xf32>,
    %9 = arith.subf %1, %5 : vector<16x128xf32>
    %c0_8 = arith.constant 0 : index
    %c0_9 = arith.constant 0 : index
    %c0_10 = arith.constant 0 : index
    %10 = vector.load %arg4[%c0_8, %c0_9, %c0_10] : memref<1x16x128xf32, #tpu.memory_space<vmem>>, vector<1x16x128xf32>
    %11 = vector.shape_cast %10 : vector<1x16x128xf32> to vector<16x128xf32>
    %12 = vector.shape_cast %9 : vector<16x128xf32> to vector<1x16x128xf32>
    tpu.vector_store %arg4[%c0_8, %c0_9, %c0_10], %12 {strides = array<i32>} : memref<1x16x128xf32, #tpu.memory_space<vmem>>, vector<1x16x128xf32>,
    return
  }
  func.func @transform_0(%arg0: i32, %arg1: i32) -> (i32, i32) {
    %c0_i32 = arith.constant 0 : i32
    %c0_i32_0 = arith.constant 0 : i32
    %c0_i32_1 = arith.constant 0 : i32
    return %c0_i32, %c0_i32_0 : i32, i32
  }
  func.func @transform_1(%arg0: i32, %arg1: i32) -> (i32, i32, i32) {
    %c0_i32 = arith.constant 0 : i32
    %c0_i32_0 = arith.constant 0 : i32
    return %arg0, %c0_i32, %arg1 : i32, i32, i32
  }
  func.func @transform_2(%arg0: i32, %arg1: i32) -> (i32, i32, i32) {
    %c0_i32 = arith.constant 0 : i32
    %c0_i32_0 = arith.constant 0 : i32
    return %arg0, %c0_i32, %arg1 : i32, i32, i32
  }
  func.func @transform_3(%arg0: i32, %arg1: i32) -> (i32, i32, i32) {
    %c0_i32 = arith.constant 0 : i32
    %c0_i32_0 = arith.constant 0 : i32
    return %arg0, %c0_i32, %arg1 : i32, i32, i32
  }
}

module attributes {stable_mosaic.version = 11 : i64} {
  func.func @_decomp_kernel(%arg0: i32, %arg1: i32, %arg2: memref<16x16xf32, #tpu.memory_space<vmem>>, %arg3: memref<1x16x128xf32, #tpu.memory_space<vmem>>, %arg4: memref<1x16x128xf32, #tpu.memory_space<vmem>>, %arg5: memref<1x16x128xf32, #tpu.memory_space<vmem>>) attributes {dimension_semantics = [#tpu.dimension_semantics<parallel>, #tpu.dimension_semantics<parallel>], iteration_bounds = array<i64: 1, 1>, scalar_prefetch = 0 : i64, scratch_operands = 0 : i64, tpu.core_type = #tpu.core_type<tc>, window_params = [{pipeline_mode = #tpu.pipeline_mode<synchronous>, transform_indices = @transform_0, window_bounds = array<i64: 16, 16>}, {transform_indices = @transform_1, window_bounds = array<i64: 1, 16, 128>}, {transform_indices = @transform_2, window_bounds = array<i64: 1, 16, 128>}, {transform_indices = @transform_3, window_bounds = array<i64: 1, 16, 128>}]} {
    %c0 = arith.constant 0 : index
    %c0_0 = arith.constant 0 : index
    %c0_1 = arith.constant 0 : index
    %0 = vector.load %arg3[%c0, %c0_0, %c0_1] : memref<1x16x128xf32, #tpu.memory_space<vmem>>, vector<1x16x128xf32>
    %1 = vector.shape_cast %0 : vector<1x16x128xf32> to vector<16x128xf32>
    %c0_2 = arith.constant 0 : index
    %c0_3 = arith.constant 0 : index
    %2 = vector.load %arg2[%c0_2, %c0_3] : memref<16x16xf32, #tpu.memory_space<vmem>>, vector<16x16xf32>
    %cst = arith.constant dense<0.000000e+00> : vector<16x128xf32>
    %3 = tpu.matmul %2, %1, %cst {dimension_numbers = #tpu.dot_dimension_numbers<[1], [0], [0], [1], [0, 0, 1, 1], [], []>, precision = #tpu.contract_precision<fp32>} : vector<16x16xf32>, vector<16x128xf32>, vector<16x128xf32> -> vector<16x128xf32>
    %cst_4 = arith.constant 2.000000e-01 : f32
    %4 = vector.broadcast %cst_4 : f32 to vector<16x128xf32>
    %5 = arith.mulf %3, %4 : vector<16x128xf32>
    %c0_5 = arith.constant 0 : index
    %c0_6 = arith.constant 0 : index
    %c0_7 = arith.constant 0 : index
    %6 = vector.load %arg5[%c0_5, %c0_6, %c0_7] : memref<1x16x128xf32, #tpu.memory_space<vmem>>, vector<1x16x128xf32>
    %7 = vector.shape_cast %6 : vector<1x16x128xf32> to vector<16x128xf32>
    %8 = vector.shape_cast %5 : vector<16x128xf32> to vector<1x16x128xf32>
    tpu.vector_store %arg5[%c0_5, %c0_6, %c0_7], %8 {strides = array<i32>} : memref<1x16x128xf32, #tpu.memory_space<vmem>>, vector<1x16x128xf32>,
    %9 = arith.subf %1, %5 : vector<16x128xf32>
    %c0_8 = arith.constant 0 : index
    %c0_9 = arith.constant 0 : index
    %c0_10 = arith.constant 0 : index
    %10 = vector.load %arg4[%c0_8, %c0_9, %c0_10] : memref<1x16x128xf32, #tpu.memory_space<vmem>>, vector<1x16x128xf32>
    %11 = vector.shape_cast %10 : vector<1x16x128xf32> to vector<16x128xf32>
    %12 = vector.shape_cast %9 : vector<16x128xf32> to vector<1x16x128xf32>
    tpu.vector_store %arg4[%c0_8, %c0_9, %c0_10], %12 {strides = array<i32>} : memref<1x16x128xf32, #tpu.memory_space<vmem>>, vector<1x16x128xf32>,
    return
  }
  func.func @transform_0(%arg0: i32, %arg1: i32) -> (i32, i32) {
    %c0_i32 = arith.constant 0 : i32
    %c0_i32_0 = arith.constant 0 : i32
    %c0_i32_1 = arith.constant 0 : i32
    return %c0_i32, %c0_i32_0 : i32, i32
  }
  func.func @transform_1(%arg0: i32, %arg1: i32) -> (i32, i32, i32) {
    %c0_i32 = arith.constant 0 : i32
    %c0_i32_0 = arith.constant 0 : i32
    return %arg0, %c0_i32, %arg1 : i32, i32, i32
  }
  func.func @transform_2(%arg0: i32, %arg1: i32) -> (i32, i32, i32) {
    %c0_i32 = arith.constant 0 : i32
    %c0_i32_0 = arith.constant 0 : i32
    return %arg0, %c0_i32, %arg1 : i32, i32, i32
  }
  func.func @transform_3(%arg0: i32, %arg1: i32) -> (i32, i32, i32) {
    %c0_i32 = arith.constant 0 : i32
    %c0_i32_0 = arith.constant 0 : i32
    return %arg0, %c0_i32, %arg1 : i32, i32, i32
  }
}

</mosaic_0001>

<llo_original>
// kernel: tpu_custom_call.1
$region0: #{tpu_custom_call.1}
  #allocation0 [shape = 'u32[]', space=smem, size = 0x4, offset = 0x4, fixed_abs, tag = 'smem constant byte address 0x4 - core index']
  #allocation1 [shape = 'u32[72,128]{1,0:T(1,128)}', space=vmem, size = 0x9000, scoped, tag = 'internal scratch']
  %s0 = inlined_call_operand.hbm [shape: f32[16,16], index: 0, kind: input, shape index: {}]
  %s1 = inlined_call_operand.hbm [shape: f32[1,16,128], index: 1, kind: input, shape index: {}]
  %s2 = inlined_call_operand.hbm [shape: f32[1,16,128], index: 2, kind: output, shape index: {0}]
  %s3 = inlined_call_operand.hbm [shape: f32[1,16,128], index: 3, kind: output, shape index: {1}]
  %4 = xla_tuple %s2, %s3
  %s5 = sld [smem:[#allocation0]]
  $region34: #{tpu_custom_call.1} parent=0
    _
  %s7 = ssub.s32 1, %s5
  %s8 = scalar_select 0, %s7, %s5
  $region1: #{tpu_custom_call.1} parent=0
    #allocation2 [shape = 'u8[8192]{0}', space=vmem, size = 0x2000, scoped, tag = 'input window, operand 0, single buffered']
    #allocation3 [shape = 's32[1]{0}', space=sflag, size = 0x4, scoped, tag = 'scoped memory for tpu_custom_call.1']
    #allocation4 [shape = 's32[1]{0}', space=sflag, size = 0x4, scoped, tag = 'scoped memory for tpu_custom_call.1']
    #allocation5 [shape = 'u8[8192]{0}', space=vmem, size = 0x2000, scoped, tag = 'input window, operand 1, single buffered']
    #allocation6 [shape = 's32[1]{0}', space=sflag, size = 0x4, scoped, tag = 'scoped memory for tpu_custom_call.1']
    #allocation7 [shape = 'u8[8192]{0}', space=vmem, size = 0x2000, scoped, tag = 'output window, operand 0, single buffered']
    #allocation8 [shape = 'u8[8192]{0}', space=vmem, size = 0x2000, scoped, tag = 'output window, operand 1, single buffered']
    #allocation9 [shape = 's32[1]{0}', space=sflag, size = 0x4, scoped, tag = 'scoped memory for tpu_custom_call.1']
    %9 = vsyncpa [#allocation3], 0
    %10 = vsyncpa [#allocation6], 0
    %11 = vsyncpa [#allocation4], 0
    %12 = vsyncpa [#allocation9], 0
    // Predicated region
    $region2: #{tpu_custom_call.1} parent=1 // pred_check
      _
    $region3: #{tpu_custom_call.1} parent=1 // pred_check_branch
      %14 = sbr.rel (0) target = $region5
    $region4: #{tpu_custom_call.1} parent=1 // pred_region
      %16 = vsyncadd [#allocation3], 0
      %s17 = sshll.u32 %s0, 4
      %s18 = int_to_ptr.hbm [resolvable:$true] %s17
      %s19 = sshll.u32 [#allocation2], 4
      %s20 = int_to_ptr.vmem [resolvable:$true] %s19
      %25 = dma.hbm_to_vmem [thread:$0]  %s18, 256, %s20, [#allocation3], 128, 128, 8
    $region5: #{tpu_custom_call.1} parent=1 // pred_fallthru
      _
    // Predicated region
    $region6: #{tpu_custom_call.1} parent=1 // pred_check
      _
    $region7: #{tpu_custom_call.1} parent=1 // pred_check_branch
      %27 = sbr.rel (0) target = $region9
    $region8: #{tpu_custom_call.1} parent=1 // pred_region
      %29 = vsyncadd [#allocation6], 0
      %s30 = sshll.u32 %s1, 4
      %s31 = int_to_ptr.hbm [resolvable:$true] %s30
      %s32 = sshll.u32 [#allocation5], 4
      %s33 = int_to_ptr.vmem [resolvable:$true] %s32
      %38 = dma.hbm_to_vmem [thread:$0]  %s31, 256, %s33, [#allocation6], 128, 128, 8
    $region9: #{tpu_custom_call.1} parent=1 // pred_fallthru
      _
    // Predicated region
    $region10: #{tpu_custom_call.1} parent=1 // pred_check
      _
    $region11: #{tpu_custom_call.1} parent=1 // pred_check_branch
      %40 = sbr.rel (0) target = $region13
    $region12: #{tpu_custom_call.1} parent=1 // pred_region
      %42 = dma.done [#allocation3], 256
    $region13: #{tpu_custom_call.1} parent=1 // pred_fallthru
      _
    // Predicated region
    $region14: #{tpu_custom_call.1} parent=1 // pred_check
      _
    $region15: #{tpu_custom_call.1} parent=1 // pred_check_branch
      %44 = sbr.rel (0) target = $region17
    $region16: #{tpu_custom_call.1} parent=1 // pred_region
      %46 = dma.done [#allocation6], 256
    $region17: #{tpu_custom_call.1} parent=1 // pred_fallthru
      _
    %v47 = vld [vmem:[#allocation5] sm:$0xff]
    %v48 = vld [vmem:[#allocation5 + $0x8] sm:$0xff]
    %v49 = vld [vmem:[#allocation2] sm:$0xff]
    %v50 = vld [vmem:[#allocation2 + $0x8] sm:$0xff]
    %vm51 = vcmask 130048
    %v53 = vsel %vm51, %v49, 0
    %v56 = vsel %vm51, %v50, 0
    %58 = vmatpush.msra.mxu0 0.0
    %59 = vmatpush.msra.mxu0 0.0
    %60 = vmatpush.msra.mxu0 0.0
    %61 = vmatpush.msra.mxu0 0.0
    %62 = vmatpush.msra.mxu0 0.0
    %63 = vmatpush.msra.mxu0 0.0
    %64 = vmatpush.msra.mxu0 0.0
    %65 = vmatpush.msra.mxu0 0.0
    %66 = vmatpush.msra.mxu0 0.0
    %67 = vmatpush.msra.mxu0 0.0
    %68 = vmatpush.msra.mxu0 0.0
    %69 = vmatpush.msra.mxu0 0.0
    %70 = vmatpush.msra.mxu0 0.0
    %71 = vmatpush.msra.mxu0 0.0
    %v72 = vand.u32 %v48, 4294901760
    %73 = vmatpush.msra.mxu0 %v72
    %v74 = vand.u32 %v47, 4294901760
    %75 = vmatpush.msra.mxu0 %v74
    %v76 = vand.u32 %v53, 4294901760
    %v77 = vsub.f32 %v53, %v76
    %v78 = vand.u32 %v77, 4294901760
    %v79 = vsub.f32 %v77, %v78
    %v80 = vand.u32 %v79, 4294901760
    %81 = vmatmul.f32.gmra.mxu0 %v80
    %v82 = vpop.f32.mrf.mxu0
    %v83 = vadd.f32 0.0, %v82
    %v84 = vand.u32 %v56, 4294901760
    %v85 = vsub.f32 %v56, %v84
    %v86 = vand.u32 %v85, 4294901760
    %v87 = vsub.f32 %v85, %v86
    %v88 = vand.u32 %v87, 4294901760
    %89 = vmatmul.f32.gmra.mxu0 %v88
    %v90 = vpop.f32.mrf.mxu0
    %v91 = vadd.f32 0.0, %v90
    %92 = vdwg.mxu0
    %93 = vmatpush.msra.mxu0 0.0
    %94 = vmatpush.msra.mxu0 0.0
    %95 = vmatpush.msra.mxu0 0.0
    %96 = vmatpush.msra.mxu0 0.0
    %97 = vmatpush.msra.mxu0 0.0
    %98 = vmatpush.msra.mxu0 0.0
    %99 = vmatpush.msra.mxu0 0.0
    %100 = vmatpush.msra.mxu0 0.0
    %101 = vmatpush.msra.mxu0 0.0
    %102 = vmatpush.msra.mxu0 0.0
    %103 = vmatpush.msra.mxu0 0.0
    %104 = vmatpush.msra.mxu0 0.0
    %105 = vmatpush.msra.mxu0 0.0
    %106 = vmatpush.msra.mxu0 0.0
    %v107 = vand.u32 %v48, 4294901760
    %v108 = vsub.f32 %v48, %v107
    %v109 = vand.u32 %v108, 4294901760
    %v110 = vsub.f32 %v108, %v109
    %v111 = vand.u32 %v110, 4294901760
    %112 = vmatpush.msra.mxu0 %v111
    %v113 = vand.u32 %v47, 4294901760
    %v114 = vsub.f32 %v47, %v113
    %v115 = vand.u32 %v114, 4294901760
    %v116 = vsub.f32 %v114, %v115
    %v117 = vand.u32 %v116, 4294901760
    %118 = vmatpush.msra.mxu0 %v117
    %v119 = vand.u32 %v53, 4294901760
    %120 = vmatmul.f32.gmra.mxu0 %v119
    %v121 = vpop.f32.mrf.mxu0
    %v122 = vadd.f32 %v83, %v121
    %v123 = vand.u32 %v56, 4294901760
    %124 = vmatmul.f32.gmra.mxu0 %v123
    %v125 = vpop.f32.mrf.mxu0
    %v126 = vadd.f32 %v91, %v125
    %127 = vdwg.mxu0
    %128 = vmatpush.msra.mxu0 0.0
    %129 = vmatpush.msra.mxu0 0.0
    %130 = vmatpush.msra.mxu0 0.0
    %131 = vmatpush.msra.mxu0 0.0
    %132 = vmatpush.msra.mxu0 0.0
    %133 = vmatpush.msra.mxu0 0.0
    %134 = vmatpush.msra.mxu0 0.0
    %135 = vmatpush.msra.mxu0 0.0
    %136 = vmatpush.msra.mxu0 0.0
    %137 = vmatpush.msra.mxu0 0.0
    %138 = vmatpush.msra.mxu0 0.0
    %139 = vmatpush.msra.mxu0 0.0
    %140 = vmatpush.msra.mxu0 0.0
    %141 = vmatpush.msra.mxu0 0.0
    %v142 = vand.u32 %v48, 4294901760
    %v143 = vsub.f32 %v48, %v142
    %144 = vmatpush.msra.mxu0 %v143
    %v145 = vand.u32 %v47, 4294901760
    %v146 = vsub.f32 %v47, %v145
    %147 = vmatpush.msra.mxu0 %v146
    %v148 = vand.u32 %v53, 4294901760
    %v149 = vsub.f32 %v53, %v148
    %150 = vmatmul.f32.gmra.mxu0 %v149
    %v151 = vpop.f32.mrf.mxu0
    %v152 = vadd.f32 %v122, %v151
    %v153 = vand.u32 %v56, 4294901760
    %v154 = vsub.f32 %v56, %v153
    %155 = vmatmul.f32.gmra.mxu0 %v154
    %v156 = vpop.f32.mrf.mxu0
    %v157 = vadd.f32 %v126, %v156
    %158 = vdwg.mxu0
    %159 = vmatpush.msra.mxu0 0.0
    %160 = vmatpush.msra.mxu0 0.0
    %161 = vmatpush.msra.mxu0 0.0
    %162 = vmatpush.msra.mxu0 0.0
    %163 = vmatpush.msra.mxu0 0.0
    %164 = vmatpush.msra.mxu0 0.0
    %165 = vmatpush.msra.mxu0 0.0
    %166 = vmatpush.msra.mxu0 0.0
    %167 = vmatpush.msra.mxu0 0.0
    %168 = vmatpush.msra.mxu0 0.0
    %169 = vmatpush.msra.mxu0 0.0
    %170 = vmatpush.msra.mxu0 0.0
    %171 = vmatpush.msra.mxu0 0.0
    %172 = vmatpush.msra.mxu0 0.0
    %v173 = vand.u32 %v48, 4294901760
    %174 = vmatpush.msra.mxu0 %v173
    %v175 = vand.u32 %v47, 4294901760
    %176 = vmatpush.msra.mxu0 %v175
    %v177 = vand.u32 %v53, 4294901760
    %v178 = vsub.f32 %v53, %v177
    %v179 = vand.u32 %v178, 4294901760
    %180 = vmatmul.f32.gmra.mxu0 %v179
    %v181 = vpop.f32.mrf.mxu0
    %v182 = vadd.f32 %v152, %v181
    %v183 = vand.u32 %v56, 4294901760
    %v184 = vsub.f32 %v56, %v183
    %v185 = vand.u32 %v184, 4294901760
    %186 = vmatmul.f32.gmra.mxu0 %v185
    %v187 = vpop.f32.mrf.mxu0
    %v188 = vadd.f32 %v157, %v187
    %189 = vdwg.mxu0
    %190 = vmatpush.msra.mxu0 0.0
    %191 = vmatpush.msra.mxu0 0.0
    %192 = vmatpush.msra.mxu0 0.0
    %193 = vmatpush.msra.mxu0 0.0
    %194 = vmatpush.msra.mxu0 0.0
    %195 = vmatpush.msra.mxu0 0.0
    %196 = vmatpush.msra.mxu0 0.0
    %197 = vmatpush.msra.mxu0 0.0
    %198 = vmatpush.msra.mxu0 0.0
    %199 = vmatpush.msra.mxu0 0.0
    %200 = vmatpush.msra.mxu0 0.0
    %201 = vmatpush.msra.mxu0 0.0
    %202 = vmatpush.msra.mxu0 0.0
    %203 = vmatpush.msra.mxu0 0.0
    %v204 = vand.u32 %v48, 4294901760
    %v205 = vsub.f32 %v48, %v204
    %v206 = vand.u32 %v205, 4294901760
    %207 = vmatpush.msra.mxu0 %v206
    %v208 = vand.u32 %v47, 4294901760
    %v209 = vsub.f32 %v47, %v208
    %v210 = vand.u32 %v209, 4294901760
    %211 = vmatpush.msra.mxu0 %v210
    %v212 = vand.u32 %v53, 4294901760
    %213 = vmatmul.f32.gmra.mxu0 %v212
    %v214 = vpop.f32.mrf.mxu0
    %v215 = vadd.f32 %v182, %v214
    %v216 = vand.u32 %v56, 4294901760
    %217 = vmatmul.f32.gmra.mxu0 %v216
    %v218 = vpop.f32.mrf.mxu0
    %v219 = vadd.f32 %v188, %v218
    %220 = vdwg.mxu0
    %221 = vmatpush.msra.mxu0 0.0
    %222 = vmatpush.msra.mxu0 0.0
    %223 = vmatpush.msra.mxu0 0.0
    %224 = vmatpush.msra.mxu0 0.0
    %225 = vmatpush.msra.mxu0 0.0
    %226 = vmatpush.msra.mxu0 0.0
    %227 = vmatpush.msra.mxu0 0.0
    %228 = vmatpush.msra.mxu0 0.0
    %229 = vmatpush.msra.mxu0 0.0
    %230 = vmatpush.msra.mxu0 0.0
    %231 = vmatpush.msra.mxu0 0.0
    %232 = vmatpush.msra.mxu0 0.0
    %233 = vmatpush.msra.mxu0 0.0
    %234 = vmatpush.msra.mxu0 0.0
    %v235 = vand.u32 %v48, 4294901760
    %236 = vmatpush.msra.mxu0 %v235
    %v237 = vand.u32 %v47, 4294901760
    %238 = vmatpush.msra.mxu0 %v237
    %v239 = vand.u32 %v53, 4294901760
    %240 = vmatmul.f32.gmra.mxu0 %v239
    %v241 = vpop.f32.mrf.mxu0
    %v242 = vadd.f32 %v215, %v241
    %v243 = vand.u32 %v56, 4294901760
    %244 = vmatmul.f32.gmra.mxu0 %v243
    %v245 = vpop.f32.mrf.mxu0
    %v246 = vadd.f32 %v219, %v245
    %247 = vdwg.mxu0
    %v248 = vmul.f32 %v242, 0.2
    %v249 = vmul.f32 %v246, 0.2
    %250 = vst [vmem:[#allocation8] sm:$0xff] %v248
    %251 = vst [vmem:[#allocation8 + $0x8] sm:$0xff] %v249
    %v252 = vsub.f32 %v47, %v248
    %v253 = vsub.f32 %v48, %v249
    %254 = vst [vmem:[#allocation7] sm:$0xff] %v252
    %255 = vst [vmem:[#allocation7 + $0x8] sm:$0xff] %v253
    // Predicated region
    $region18: #{tpu_custom_call.1} parent=1 // pred_check
      _
    $region19: #{tpu_custom_call.1} parent=1 // pred_check_branch
      %257 = sbr.rel (0) target = $region21
    $region20: #{tpu_custom_call.1} parent=1 // pred_region
      %259 = vsyncadd [#allocation4], 0
      %s260 = sshll.u32 [#allocation7], 4
      %s261 = int_to_ptr.vmem [resolvable:$true] %s260
      %s262 = sshll.u32 %s2, 4
      %s263 = int_to_ptr.hbm [resolvable:$true] %s262
      %268 = dma.vmem_to_hbm [thread:$0]  %s261, 256, %s263, [#allocation4], 128, 128, 8
    $region21: #{tpu_custom_call.1} parent=1 // pred_fallthru
      _
    // Predicated region
    $region22: #{tpu_custom_call.1} parent=1 // pred_check
      _
    $region23: #{tpu_custom_call.1} parent=1 // pred_check_branch
      %270 = sbr.rel (0) target = $region25
    $region24: #{tpu_custom_call.1} parent=1 // pred_region
      %272 = vsyncadd [#allocation9], 0
      %s273 = sshll.u32 [#allocation8], 4
      %s274 = int_to_ptr.vmem [resolvable:$true] %s273
      %s275 = sshll.u32 %s3, 4
      %s276 = int_to_ptr.hbm [resolvable:$true] %s275
      %281 = dma.vmem_to_hbm [thread:$0]  %s274, 256, %s276, [#allocation9], 128, 128, 8
    $region25: #{tpu_custom_call.1} parent=1 // pred_fallthru
      _
    // Predicated region
    $region26: #{tpu_custom_call.1} parent=1 // pred_check
      _
    $region27: #{tpu_custom_call.1} parent=1 // pred_check_branch
      %283 = sbr.rel (0) target = $region29
    $region28: #{tpu_custom_call.1} parent=1 // pred_region
      %285 = dma.done [#allocation4], 256
    $region29: #{tpu_custom_call.1} parent=1 // pred_fallthru
      _
    // Predicated region
    $region30: #{tpu_custom_call.1} parent=1 // pred_check
      _
    $region31: #{tpu_custom_call.1} parent=1 // pred_check_branch
      %287 = sbr.rel (0) target = $region33
    $region32: #{tpu_custom_call.1} parent=1 // pred_region
      %289 = dma.done [#allocation9], 256
    $region33: #{tpu_custom_call.1} parent=1 // pred_fallthru
      _
    %290 = vsyncpa [#allocation3], 1
    %291 = vsyncpa [#allocation6], 1
    %292 = vsyncpa [#allocation4], 1
    %293 = vsyncpa [#allocation9], 1

// kernel: tpu_custom_call.1
$region0: #{tpu_custom_call.1}
  #allocation0 [shape = 'u32[]', space=smem, size = 0x4, offset = 0x4, fixed_abs, tag = 'smem constant byte address 0x4 - core index']
  #allocation1 [shape = 'u32[72,128]{1,0:T(1,128)}', space=vmem, size = 0x9000, scoped, tag = 'internal scratch']
  %s0 = inlined_call_operand.hbm [shape: f32[16,16], index: 0, kind: input, shape index: {}]
  %s1 = inlined_call_operand.hbm [shape: f32[1,16,128], index: 1, kind: input, shape index: {}]
  %s2 = inlined_call_operand.hbm [shape: f32[1,16,128], index: 2, kind: output, shape index: {0}]
  %s3 = inlined_call_operand.hbm [shape: f32[1,16,128], index: 3, kind: output, shape index: {1}]
  %4 = xla_tuple %s2, %s3
  %s5 = sld [smem:[#allocation0]]
  $region34: #{tpu_custom_call.1} parent=0
    _
  %s7 = ssub.s32 1, %s5
  %s8 = scalar_select 0, %s7, %s5
  $region1: #{tpu_custom_call.1} parent=0
    #allocation2 [shape = 'u8[8192]{0}', space=vmem, size = 0x2000, scoped, tag = 'input window, operand 0, single buffered']
    #allocation3 [shape = 's32[1]{0}', space=sflag, size = 0x4, scoped, tag = 'scoped memory for tpu_custom_call.1']
    #allocation4 [shape = 's32[1]{0}', space=sflag, size = 0x4, scoped, tag = 'scoped memory for tpu_custom_call.1']
    #allocation5 [shape = 'u8[8192]{0}', space=vmem, size = 0x2000, scoped, tag = 'input window, operand 1, single buffered']
    #allocation6 [shape = 's32[1]{0}', space=sflag, size = 0x4, scoped, tag = 'scoped memory for tpu_custom_call.1']
    #allocation7 [shape = 'u8[8192]{0}', space=vmem, size = 0x2000, scoped, tag = 'output window, operand 0, single buffered']
    #allocation8 [shape = 'u8[8192]{0}', space=vmem, size = 0x2000, scoped, tag = 'output window, operand 1, single buffered']
    #allocation9 [shape = 's32[1]{0}', space=sflag, size = 0x4, scoped, tag = 'scoped memory for tpu_custom_call.1']
    %9 = vsyncpa [#allocation3], 0
    %10 = vsyncpa [#allocation6], 0
    %11 = vsyncpa [#allocation4], 0
    %12 = vsyncpa [#allocation9], 0
    // Predicated region
    $region2: #{tpu_custom_call.1} parent=1 // pred_check
      _
    $region3: #{tpu_custom_call.1} parent=1 // pred_check_branch
      %14 = sbr.rel (0) target = $region5
    $region4: #{tpu_custom_call.1} parent=1 // pred_region
      %16 = vsyncadd [#allocation3], 0
      %s17 = sshll.u32 %s0, 4
      %s18 = int_to_ptr.hbm [resolvable:$true] %s17
      %s19 = sshll.u32 [#allocation2], 4
      %s20 = int_to_ptr.vmem [resolvable:$true] %s19
      %25 = dma.hbm_to_vmem [thread:$0]  %s18, 256, %s20, [#allocation3], 128, 128, 8
    $region5: #{tpu_custom_call.1} parent=1 // pred_fallthru
      _
    // Predicated region
    $region6: #{tpu_custom_call.1} parent=1 // pred_check
      _
    $region7: #{tpu_custom_call.1} parent=1 // pred_check_branch
      %27 = sbr.rel (0) target = $region9
    $region8: #{tpu_custom_call.1} parent=1 // pred_region
      %29 = vsyncadd [#allocation6], 0
      %s30 = sshll.u32 %s1, 4
      %s31 = int_to_ptr.hbm [resolvable:$true] %s30
      %s32 = sshll.u32 [#allocation5], 4
      %s33 = int_to_ptr.vmem [resolvable:$true] %s32
      %38 = dma.hbm_to_vmem [thread:$0]  %s31, 256, %s33, [#allocation6], 128, 128, 8
    $region9: #{tpu_custom_call.1} parent=1 // pred_fallthru
      _
    // Predicated region
    $region10: #{tpu_custom_call.1} parent=1 // pred_check
      _
    $region11: #{tpu_custom_call.1} parent=1 // pred_check_branch
      %40 = sbr.rel (0) target = $region13
    $region12: #{tpu_custom_call.1} parent=1 // pred_region
      %42 = dma.done [#allocation3], 256
    $region13: #{tpu_custom_call.1} parent=1 // pred_fallthru
      _
    // Predicated region
    $region14: #{tpu_custom_call.1} parent=1 // pred_check
      _
    $region15: #{tpu_custom_call.1} parent=1 // pred_check_branch
      %44 = sbr.rel (0) target = $region17
    $region16: #{tpu_custom_call.1} parent=1 // pred_region
      %46 = dma.done [#allocation6], 256
    $region17: #{tpu_custom_call.1} parent=1 // pred_fallthru
      _
    %v47 = vld [vmem:[#allocation5] sm:$0xff]
    %v48 = vld [vmem:[#allocation5 + $0x8] sm:$0xff]
    %v49 = vld [vmem:[#allocation2] sm:$0xff]
    %v50 = vld [vmem:[#allocation2 + $0x8] sm:$0xff]
    %vm51 = vcmask 130048
    %v53 = vsel %vm51, %v49, 0
    %v56 = vsel %vm51, %v50, 0
    %58 = vmatpush.msra.mxu0 0.0
    %59 = vmatpush.msra.mxu0 0.0
    %60 = vmatpush.msra.mxu0 0.0
    %61 = vmatpush.msra.mxu0 0.0
    %62 = vmatpush.msra.mxu0 0.0
    %63 = vmatpush.msra.mxu0 0.0
    %64 = vmatpush.msra.mxu0 0.0
    %65 = vmatpush.msra.mxu0 0.0
    %66 = vmatpush.msra.mxu0 0.0
    %67 = vmatpush.msra.mxu0 0.0
    %68 = vmatpush.msra.mxu0 0.0
    %69 = vmatpush.msra.mxu0 0.0
    %70 = vmatpush.msra.mxu0 0.0
    %71 = vmatpush.msra.mxu0 0.0
    %v72 = vand.u32 %v48, 4294901760
    %73 = vmatpush.msra.mxu0 %v72
    %v74 = vand.u32 %v47, 4294901760
    %75 = vmatpush.msra.mxu0 %v74
    %v76 = vand.u32 %v53, 4294901760
    %v77 = vsub.f32 %v53, %v76
    %v78 = vand.u32 %v77, 4294901760
    %v79 = vsub.f32 %v77, %v78
    %v80 = vand.u32 %v79, 4294901760
    %81 = vmatmul.f32.gmra.mxu0 %v80
    %v82 = vpop.f32.mrf.mxu0
    %v83 = vadd.f32 0.0, %v82
    %v84 = vand.u32 %v56, 4294901760
    %v85 = vsub.f32 %v56, %v84
    %v86 = vand.u32 %v85, 4294901760
    %v87 = vsub.f32 %v85, %v86
    %v88 = vand.u32 %v87, 4294901760
    %89 = vmatmul.f32.gmra.mxu0 %v88
    %v90 = vpop.f32.mrf.mxu0
    %v91 = vadd.f32 0.0, %v90
    %92 = vdwg.mxu0
    %93 = vmatpush.msra.mxu0 0.0
    %94 = vmatpush.msra.mxu0 0.0
    %95 = vmatpush.msra.mxu0 0.0
    %96 = vmatpush.msra.mxu0 0.0
    %97 = vmatpush.msra.mxu0 0.0
    %98 = vmatpush.msra.mxu0 0.0
    %99 = vmatpush.msra.mxu0 0.0
    %100 = vmatpush.msra.mxu0 0.0
    %101 = vmatpush.msra.mxu0 0.0
    %102 = vmatpush.msra.mxu0 0.0
    %103 = vmatpush.msra.mxu0 0.0
    %104 = vmatpush.msra.mxu0 0.0
    %105 = vmatpush.msra.mxu0 0.0
    %106 = vmatpush.msra.mxu0 0.0
    %v107 = vand.u32 %v48, 4294901760
    %v108 = vsub.f32 %v48, %v107
    %v109 = vand.u32 %v108, 4294901760
    %v110 = vsub.f32 %v108, %v109
    %v111 = vand.u32 %v110, 4294901760
    %112 = vmatpush.msra.mxu0 %v111
    %v113 = vand.u32 %v47, 4294901760
    %v114 = vsub.f32 %v47, %v113
    %v115 = vand.u32 %v114, 4294901760
    %v116 = vsub.f32 %v114, %v115
    %v117 = vand.u32 %v116, 4294901760
    %118 = vmatpush.msra.mxu0 %v117
    %v119 = vand.u32 %v53, 4294901760
    %120 = vmatmul.f32.gmra.mxu0 %v119
    %v121 = vpop.f32.mrf.mxu0
    %v122 = vadd.f32 %v83, %v121
    %v123 = vand.u32 %v56, 4294901760
    %124 = vmatmul.f32.gmra.mxu0 %v123
    %v125 = vpop.f32.mrf.mxu0
    %v126 = vadd.f32 %v91, %v125
    %127 = vdwg.mxu0
    %128 = vmatpush.msra.mxu0 0.0
    %129 = vmatpush.msra.mxu0 0.0
    %130 = vmatpush.msra.mxu0 0.0
    %131 = vmatpush.msra.mxu0 0.0
    %132 = vmatpush.msra.mxu0 0.0
    %133 = vmatpush.msra.mxu0 0.0
    %134 = vmatpush.msra.mxu0 0.0
    %135 = vmatpush.msra.mxu0 0.0
    %136 = vmatpush.msra.mxu0 0.0
    %137 = vmatpush.msra.mxu0 0.0
    %138 = vmatpush.msra.mxu0 0.0
    %139 = vmatpush.msra.mxu0 0.0
    %140 = vmatpush.msra.mxu0 0.0
    %141 = vmatpush.msra.mxu0 0.0
    %v142 = vand.u32 %v48, 4294901760
    %v143 = vsub.f32 %v48, %v142
    %144 = vmatpush.msra.mxu0 %v143
    %v145 = vand.u32 %v47, 4294901760
    %v146 = vsub.f32 %v47, %v145
    %147 = vmatpush.msra.mxu0 %v146
    %v148 = vand.u32 %v53, 4294901760
    %v149 = vsub.f32 %v53, %v148
    %150 = vmatmul.f32.gmra.mxu0 %v149
    %v151 = vpop.f32.mrf.mxu0
    %v152 = vadd.f32 %v122, %v151
    %v153 = vand.u32 %v56, 4294901760
    %v154 = vsub.f32 %v56, %v153
    %155 = vmatmul.f32.gmra.mxu0 %v154
    %v156 = vpop.f32.mrf.mxu0
    %v157 = vadd.f32 %v126, %v156
    %158 = vdwg.mxu0
    %159 = vmatpush.msra.mxu0 0.0
    %160 = vmatpush.msra.mxu0 0.0
    %161 = vmatpush.msra.mxu0 0.0
    %162 = vmatpush.msra.mxu0 0.0
    %163 = vmatpush.msra.mxu0 0.0
    %164 = vmatpush.msra.mxu0 0.0
    %165 = vmatpush.msra.mxu0 0.0
    %166 = vmatpush.msra.mxu0 0.0
    %167 = vmatpush.msra.mxu0 0.0
    %168 = vmatpush.msra.mxu0 0.0
    %169 = vmatpush.msra.mxu0 0.0
    %170 = vmatpush.msra.mxu0 0.0
    %171 = vmatpush.msra.mxu0 0.0
    %172 = vmatpush.msra.mxu0 0.0
    %v173 = vand.u32 %v48, 4294901760
    %174 = vmatpush.msra.mxu0 %v173
    %v175 = vand.u32 %v47, 4294901760
    %176 = vmatpush.msra.mxu0 %v175
    %v177 = vand.u32 %v53, 4294901760
    %v178 = vsub.f32 %v53, %v177
    %v179 = vand.u32 %v178, 4294901760
    %180 = vmatmul.f32.gmra.mxu0 %v179
    %v181 = vpop.f32.mrf.mxu0
    %v182 = vadd.f32 %v152, %v181
    %v183 = vand.u32 %v56, 4294901760
    %v184 = vsub.f32 %v56, %v183
    %v185 = vand.u32 %v184, 4294901760
    %186 = vmatmul.f32.gmra.mxu0 %v185
    %v187 = vpop.f32.mrf.mxu0
    %v188 = vadd.f32 %v157, %v187
    %189 = vdwg.mxu0
    %190 = vmatpush.msra.mxu0 0.0
    %191 = vmatpush.msra.mxu0 0.0
    %192 = vmatpush.msra.mxu0 0.0
    %193 = vmatpush.msra.mxu0 0.0
    %194 = vmatpush.msra.mxu0 0.0
    %195 = vmatpush.msra.mxu0 0.0
    %196 = vmatpush.msra.mxu0 0.0
    %197 = vmatpush.msra.mxu0 0.0
    %198 = vmatpush.msra.mxu0 0.0
    %199 = vmatpush.msra.mxu0 0.0
    %200 = vmatpush.msra.mxu0 0.0
    %201 = vmatpush.msra.mxu0 0.0
    %202 = vmatpush.msra.mxu0 0.0
    %203 = vmatpush.msra.mxu0 0.0
    %v204 = vand.u32 %v48, 4294901760
    %v205 = vsub.f32 %v48, %v204
    %v206 = vand.u32 %v205, 4294901760
    %207 = vmatpush.msra.mxu0 %v206
    %v208 = vand.u32 %v47, 4294901760
    %v209 = vsub.f32 %v47, %v208
    %v210 = vand.u32 %v209, 4294901760
    %211 = vmatpush.msra.mxu0 %v210
    %v212 = vand.u32 %v53, 4294901760
    %213 = vmatmul.f32.gmra.mxu0 %v212
    %v214 = vpop.f32.mrf.mxu0
    %v215 = vadd.f32 %v182, %v214
    %v216 = vand.u32 %v56, 4294901760
    %217 = vmatmul.f32.gmra.mxu0 %v216
    %v218 = vpop.f32.mrf.mxu0
    %v219 = vadd.f32 %v188, %v218
    %220 = vdwg.mxu0
    %221 = vmatpush.msra.mxu0 0.0
    %222 = vmatpush.msra.mxu0 0.0
    %223 = vmatpush.msra.mxu0 0.0
    %224 = vmatpush.msra.mxu0 0.0
    %225 = vmatpush.msra.mxu0 0.0
    %226 = vmatpush.msra.mxu0 0.0
    %227 = vmatpush.msra.mxu0 0.0
    %228 = vmatpush.msra.mxu0 0.0
    %229 = vmatpush.msra.mxu0 0.0
    %230 = vmatpush.msra.mxu0 0.0
    %231 = vmatpush.msra.mxu0 0.0
    %232 = vmatpush.msra.mxu0 0.0
    %233 = vmatpush.msra.mxu0 0.0
    %234 = vmatpush.msra.mxu0 0.0
    %v235 = vand.u32 %v48, 4294901760
    %236 = vmatpush.msra.mxu0 %v235
    %v237 = vand.u32 %v47, 4294901760
    %238 = vmatpush.msra.mxu0 %v237
    %v239 = vand.u32 %v53, 4294901760
    %240 = vmatmul.f32.gmra.mxu0 %v239
    %v241 = vpop.f32.mrf.mxu0
    %v242 = vadd.f32 %v215, %v241
    %v243 = vand.u32 %v56, 4294901760
    %244 = vmatmul.f32.gmra.mxu0 %v243
    %v245 = vpop.f32.mrf.mxu0
    %v246 = vadd.f32 %v219, %v245
    %247 = vdwg.mxu0
    %v248 = vmul.f32 %v242, 0.2
    %v249 = vmul.f32 %v246, 0.2
    %250 = vst [vmem:[#allocation8] sm:$0xff] %v248
    %251 = vst [vmem:[#allocation8 + $0x8] sm:$0xff] %v249
    %v252 = vsub.f32 %v47, %v248
    %v253 = vsub.f32 %v48, %v249
    %254 = vst [vmem:[#allocation7] sm:$0xff] %v252
    %255 = vst [vmem:[#allocation7 + $0x8] sm:$0xff] %v253
    // Predicated region
    $region18: #{tpu_custom_call.1} parent=1 // pred_check
      _
    $region19: #{tpu_custom_call.1} parent=1 // pred_check_branch
      %257 = sbr.rel (0) target = $region21
    $region20: #{tpu_custom_call.1} parent=1 // pred_region
      %259 = vsyncadd [#allocation4], 0
      %s260 = sshll.u32 [#allocation7], 4
      %s261 = int_to_ptr.vmem [resolvable:$true] %s260
      %s262 = sshll.u32 %s2, 4
      %s263 = int_to_ptr.hbm [resolvable:$true] %s262
      %268 = dma.vmem_to_hbm [thread:$0]  %s261, 256, %s263, [#allocation4], 128, 128, 8
    $region21: #{tpu_custom_call.1} parent=1 // pred_fallthru
      _
    // Predicated region
    $region22: #{tpu_custom_call.1} parent=1 // pred_check
      _
    $region23: #{tpu_custom_call.1} parent=1 // pred_check_branch
      %270 = sbr.rel (0) target = $region25
    $region24: #{tpu_custom_call.1} parent=1 // pred_region
      %272 = vsyncadd [#allocation9], 0
      %s273 = sshll.u32 [#allocation8], 4
      %s274 = int_to_ptr.vmem [resolvable:$true] %s273
      %s275 = sshll.u32 %s3, 4
      %s276 = int_to_ptr.hbm [resolvable:$true] %s275
      %281 = dma.vmem_to_hbm [thread:$0]  %s274, 256, %s276, [#allocation9], 128, 128, 8
    $region25: #{tpu_custom_call.1} parent=1 // pred_fallthru
      _
    // Predicated region
    $region26: #{tpu_custom_call.1} parent=1 // pred_check
      _
    $region27: #{tpu_custom_call.1} parent=1 // pred_check_branch
      %283 = sbr.rel (0) target = $region29
    $region28: #{tpu_custom_call.1} parent=1 // pred_region
      %285 = dma.done [#allocation4], 256
    $region29: #{tpu_custom_call.1} parent=1 // pred_fallthru
      _
    // Predicated region
    $region30: #{tpu_custom_call.1} parent=1 // pred_check
      _
    $region31: #{tpu_custom_call.1} parent=1 // pred_check_branch
      %287 = sbr.rel (0) target = $region33
    $region32: #{tpu_custom_call.1} parent=1 // pred_region
      %289 = dma.done [#allocation9], 256
    $region33: #{tpu_custom_call.1} parent=1 // pred_fallthru
      _
    %290 = vsyncpa [#allocation3], 1
    %291 = vsyncpa [#allocation6], 1
    %292 = vsyncpa [#allocation4], 1
    %293 = vsyncpa [#allocation9], 1

</llo_original>
